<compile_context>
chip_gen: v7x
topology: tpu7x:2x2x1
jax: 0.10.0
libtpu: 0.0.40
codegen_flags: <defaults>
</compile_context>

<pallas_src>
import functools

import jax
import jax.numpy as jnp
from jax.experimental import pallas as pl
from jax.experimental.pallas import tpu as pltpu

_LANES = 512    # lane-dense column count (multiple of 128)
_TM_MAX = 512   # max rows per tile -> 512*512*4B = 1 MiB per f32 input tile
_P_MAX = 2      # parallel partitions (v7x has 2 TensorCores)


def _cdiv(a, b):
    return -(-a // b)


def _round_up(a, m):
    return _cdiv(a, m) * m


def _mean_diff_kernel(x_ref, y_ref, o_ref, acc_ref, *, loss_type):
    j = pl.program_id(1)

    @pl.when(j == 0)
    def _():
        acc_ref[...] = jnp.zeros_like(acc_ref)

    d = x_ref[...].astype(jnp.float32) - y_ref[...].astype(jnp.float32)
    val = jnp.abs(d) if loss_type == "L1" else d * d
    row = jnp.sum(val, axis=-1, keepdims=True)        # (tm, 1), lane reduce on XLU
    acc_ref[...] += jnp.sum(row)                      # scalar partial, broadcast add

    @pl.when(j == pl.num_programs(1) - 1)
    def _():
        o_ref[...] = acc_ref[...]


def _mean_diff_kernel_w(x_ref, y_ref, w_ref, o_ref, acc_ref, *, loss_type):
    j = pl.program_id(1)

    @pl.when(j == 0)
    def _():
        acc_ref[...] = jnp.zeros_like(acc_ref)

    d = x_ref[...].astype(jnp.float32) - y_ref[...].astype(jnp.float32)
    w = w_ref[...].astype(jnp.float32)
    val = jnp.abs(d * w) if loss_type == "L1" else d * d * w
    row = jnp.sum(val, axis=-1, keepdims=True)
    acc_ref[...] += jnp.sum(row)

    @pl.when(j == pl.num_programs(1) - 1)
    def _():
        o_ref[...] = acc_ref[...]


def mean_difference(target, value, loss_type="L1", weights=None, dims=None):
    """Pallas-backed mean_difference (dims=None -> scalar mean)."""
    loss_type = loss_type.upper()
    if loss_type not in ("L1", "L2"):
        raise ValueError('Loss type ({}), must be "L1", "L2" '.format(loss_type))
    if dims is not None and sorted(int(d) % target.ndim for d in dims) != list(
            range(target.ndim)):
        # TODO(synk): partial-axis reduction (dims != all axes) not implemented.
        raise NotImplementedError("only the full mean (dims=None) is supported")
    assert target.shape == value.shape

    total = 1
    for s in target.shape:
        total *= int(s)

    # --- lane-dense slab layout + tiling ---------------------------------
    n_rows = _cdiv(total, _LANES)
    tm = min(_TM_MAX, _round_up(n_rows, 8))           # rows per tile, mult of 8
    n_blocks = _cdiv(n_rows, tm)
    p = min(_P_MAX, n_blocks)                         # parallel partitions
    n_blocks = _round_up(n_blocks, p)
    blocks_per_part = n_blocks // p
    rows = n_blocks * tm

    def to_slab(a):
        flat = jnp.asarray(a).reshape(-1)
        flat = jnp.pad(flat, (0, rows * _LANES - flat.shape[0]))
        return flat.reshape(rows, _LANES)

    def in_map(pi, j):
        return (pi * blocks_per_part + j, 0)

    args = [to_slab(target), to_slab(value)]
    in_specs = [pl.BlockSpec((tm, _LANES), in_map),
                pl.BlockSpec((tm, _LANES), in_map)]
    if weights is not None:
        w = jnp.broadcast_to(jnp.asarray(weights, target.dtype), target.shape)
        args.append(to_slab(w))
        in_specs.append(pl.BlockSpec((tm, _LANES), in_map))
        kernel = functools.partial(_mean_diff_kernel_w, loss_type=loss_type)
    else:
        kernel = functools.partial(_mean_diff_kernel, loss_type=loss_type)

    itemsize = jnp.dtype(target.dtype).itemsize
    cost = pl.CostEstimate(
        flops=4 * rows * _LANES,
        transcendentals=0,
        bytes_accessed=len(args) * rows * _LANES * itemsize + p * 8 * 128 * 4,
    )

    partials = pl.pallas_call(
        kernel,
        out_shape=jax.ShapeDtypeStruct((p * 8, 128), jnp.float32),
        grid_spec=pltpu.PrefetchScalarGridSpec(
            num_scalar_prefetch=0,
            grid=(p, blocks_per_part),
            in_specs=in_specs,
            out_specs=pl.BlockSpec((8, 128), lambda pi, j: (pi, 0)),
            scratch_shapes=[pltpu.VMEM((8, 128), jnp.float32)],
        ),
        compiler_params=pltpu.CompilerParams(
            dimension_semantics=("parallel", "arbitrary"),
            vmem_limit_bytes=32 * 1024 * 1024,
        ),
        cost_estimate=cost,
    )(*args)

    # Each partition wrote its scalar partial replicated over its (8,128)
    # block; pick one element per partition, sum, scale by compile-time 1/N.
    part = partials.reshape(p, 8, 128)[:, 0, 0]
    return jnp.sum(part) * (1.0 / total)


class MeanDifference:
    """Mirror of the PyTorch nn.Module."""

    def __init__(self, loss_type="L1"):
        self.loss_type = loss_type

    def __call__(self, x, y, weights=None, sort=False, **kwargs):
        if sort:
            # TODO(synk): no clean in-kernel sort primitive on TPU Pallas;
            # sorting is done with jnp.sort in the wrapper (same semantics).
            x = jnp.sort(x, axis=-1)
            y = jnp.sort(y, axis=-1)
        return mean_difference(x, y, loss_type=self.loss_type,
                               weights=weights, dims=kwargs.get("dims", None))


def _mean_difference_ref(target, value, loss_type="L1", weights=None):
    """Pure-JAX reference mirroring the PyTorch forward (dims=None)."""
    d = (target - value).astype(jnp.float32)
    w = 1.0 if weights is None else jnp.asarray(weights, jnp.float32)
    if loss_type.upper() == "L1":
        return jnp.mean(jnp.abs(d * w))
    return jnp.mean(d * d * w)


if __name__ == "__main__":
    key = jax.random.PRNGKey(0)
    k1, k2, k3, k4, k5 = jax.random.split(key, 5)

    # Small shapes consistent with the module: a 3-D (batch, seq, hidden)
    # pair and a 4-D (batch, channels, H, W) pair.
    x3 = jax.random.normal(k1, (2, 8, 32), jnp.float32)
    y3 = jax.random.normal(k2, (2, 8, 32), jnp.float32)
    x4 = jax.random.normal(k3, (2, 4, 16, 16), jnp.float32)
    y4 = jax.random.normal(k4, (2, 4, 16, 16), jnp.float32)
    w4 = jax.nn.sigmoid(jax.random.normal(k5, (2, 4, 16, 16), jnp.float32))

    l1 = MeanDifference("L1")
    l2 = MeanDifference("L2")

    cases = [
        (l1(x3, y3), _mean_difference_ref(x3, y3, "L1")),
        (l2(x3, y3), _mean_difference_ref(x3, y3, "L2")),
        (l1(x4, y4, weights=w4), _mean_difference_ref(x4, y4, "L1", w4)),
        (l2(x4, y4, weights=w4), _mean_difference_ref(x4, y4, "L2", w4)),
        (l1(x3, y3, sort=True),
         _mean_difference_ref(jnp.sort(x3, -1), jnp.sort(y3, -1), "L1")),
    ]
    for got, ref in cases:
        got = jax.block_until_ready(got)
        assert jnp.allclose(got, ref, atol=1e-5, rtol=1e-5), (got, ref)

    print("KERNEL_OK")
</pallas_src>

<mosaic_0001>
module attributes {stable_mosaic.version = 11 : i64} {
  func.func @_mean_diff_kernel(%arg0: i32, %arg1: i32, %arg2: memref<8x512xf32, #tpu.memory_space<vmem>>, %arg3: memref<8x512xf32, #tpu.memory_space<vmem>>, %arg4: memref<8x128xf32, #tpu.memory_space<vmem>>, %arg5: memref<8x128xf32, #tpu.memory_space<vmem>>) attributes {dimension_semantics = [#tpu.dimension_semantics<parallel>, #tpu.dimension_semantics<arbitrary>], iteration_bounds = array<i64: 1, 1>, scalar_prefetch = 0 : i64, scratch_operands = 1 : i64, tpu.core_type = #tpu.core_type<tc>, window_params = [{transform_indices = @transform_0, window_bounds = array<i64: 8, 512>}, {transform_indices = @transform_1, window_bounds = array<i64: 8, 512>}, {transform_indices = @transform_2, window_bounds = array<i64: 8, 128>}]} {
    %c0_i32 = arith.constant 0 : i32
    %0 = arith.cmpi eq, %arg1, %c0_i32 : i32
    %1 = arith.extui %0 : i1 to i32
    %c0_i32_0 = arith.constant 0 : i32
    %2 = arith.cmpi ne, %1, %c0_i32_0 : i32
    scf.if %2 {
      %cst_11 = arith.constant 0.000000e+00 : f32
      %20 = vector.broadcast %cst_11 : f32 to vector<8x128xf32>
      %c0_12 = arith.constant 0 : index
      %c0_13 = arith.constant 0 : index
      %21 = vector.load %arg5[%c0_12, %c0_13] : memref<8x128xf32, #tpu.memory_space<vmem>>, vector<8x128xf32>
      tpu.vector_store %arg5[%c0_12, %c0_13], %20 {strides = array<i32>} : memref<8x128xf32, #tpu.memory_space<vmem>>, vector<8x128xf32>,
    } else {
    }
    %c0 = arith.constant 0 : index
    %c0_1 = arith.constant 0 : index
    %3 = vector.load %arg2[%c0, %c0_1] : memref<8x512xf32, #tpu.memory_space<vmem>>, vector<8x512xf32>
    %c0_2 = arith.constant 0 : index
    %c0_3 = arith.constant 0 : index
    %4 = vector.load %arg3[%c0_2, %c0_3] : memref<8x512xf32, #tpu.memory_space<vmem>>, vector<8x512xf32>
    %5 = arith.subf %3, %4 : vector<8x512xf32>
    %6 = math.absf %5 : vector<8x512xf32>
    %cst = arith.constant dense<0.000000e+00> : vector<8xf32>
    %7 = vector.multi_reduction <add>, %6, %cst [1] : vector<8x512xf32> to vector<8xf32>
    %8 = vector.shape_cast %7 : vector<8xf32> to vector<8x1xf32>
    %c0_4 = arith.constant 0 : index
    %c0_5 = arith.constant 0 : index
    %9 = vector.load %arg5[%c0_4, %c0_5] : memref<8x128xf32, #tpu.memory_space<vmem>>, vector<8x128xf32>
    %10 = vector.shape_cast %8 : vector<8x1xf32> to vector<1x8x1xf32>
    %cst_6 = arith.constant dense<0.000000e+00> : vector<1xf32>
    %11 = vector.multi_reduction <add>, %10, %cst_6 [1, 2] : vector<1x8x1xf32> to vector<1xf32>
    %12 = vector.shape_cast %11 : vector<1xf32> to vector<1x1x1xf32>
    %13 = vector.extract %12[0, 0, 0] : f32 from vector<1x1x1xf32>
    %14 = vector.broadcast %13 : f32 to vector<8x128xf32>
    %15 = arith.addf %9, %14 : vector<8x128xf32>
    %c0_7 = arith.constant 0 : index
    %c0_8 = arith.constant 0 : index
    %16 = vector.load %arg5[%c0_7, %c0_8] : memref<8x128xf32, #tpu.memory_space<vmem>>, vector<8x128xf32>
    tpu.vector_store %arg5[%c0_7, %c0_8], %15 {strides = array<i32>} : memref<8x128xf32, #tpu.memory_space<vmem>>, vector<8x128xf32>,
    %c0_i32_9 = arith.constant 0 : i32
    %17 = arith.cmpi eq, %arg1, %c0_i32_9 : i32
    %18 = arith.extui %17 : i1 to i32
    %c0_i32_10 = arith.constant 0 : i32
    %19 = arith.cmpi ne, %18, %c0_i32_10 : i32
    scf.if %19 {
      %c0_11 = arith.constant 0 : index
      %c0_12 = arith.constant 0 : index
      %20 = vector.load %arg5[%c0_11, %c0_12] : memref<8x128xf32, #tpu.memory_space<vmem>>, vector<8x128xf32>
      %c0_13 = arith.constant 0 : index
      %c0_14 = arith.constant 0 : index
      %21 = vector.load %arg4[%c0_13, %c0_14] : memref<8x128xf32, #tpu.memory_space<vmem>>, vector<8x128xf32>
      tpu.vector_store %arg4[%c0_13, %c0_14], %20 {strides = array<i32>} : memref<8x128xf32, #tpu.memory_space<vmem>>, vector<8x128xf32>,
    } else {
    }
    return
  }
  func.func @transform_0(%arg0: i32, %arg1: i32) -> (i32, i32) {
    %c1_i32 = arith.constant 1 : i32
    %0 = arith.muli %arg0, %c1_i32 : i32
    %1 = arith.addi %0, %arg1 : i32
    %c0_i32 = arith.constant 0 : i32
    %c0_i32_0 = arith.constant 0 : i32
    return %1, %c0_i32 : i32, i32
  }
  func.func @transform_1(%arg0: i32, %arg1: i32) -> (i32, i32) {
    %c1_i32 = arith.constant 1 : i32
    %0 = arith.muli %arg0, %c1_i32 : i32
    %1 = arith.addi %0, %arg1 : i32
    %c0_i32 = arith.constant 0 : i32
    %c0_i32_0 = arith.constant 0 : i32
    return %1, %c0_i32 : i32, i32
  }
  func.func @transform_2(%arg0: i32, %arg1: i32) -> (i32, i32) {
    %c0_i32 = arith.constant 0 : i32
    %c0_i32_0 = arith.constant 0 : i32
    return %arg0, %c0_i32 : i32, i32
  }
}

</mosaic_0001>

<llo_original>
// kernel: tpu_custom_call.1
$region0: #{tpu_custom_call.1}
  #allocation0 [shape = 'u32[]', space=smem, size = 0x4, offset = 0x4, fixed_abs, tag = 'smem constant byte address 0x4 - core index']
  #allocation1 [shape = 'u32[144,128]{1,0:T(1,128)}', space=vmem, size = 0x12000, scoped, tag = 'internal scratch']
  #allocation2 [shape = 'f32[8,128]{1,0:T(8,128)}', space=vmem, size = 0x1000, scoped, tag = 'scratch operand']
  %s0 = inlined_call_operand.hbm [shape: f32[8,512], index: 0, kind: input, shape index: {}]
  %s1 = inlined_call_operand.hbm [shape: f32[8,512], index: 1, kind: input, shape index: {}]
  %s2 = inlined_call_operand.hbm [shape: f32[8,128], index: 2, kind: output, shape index: {}]
  %s3 = sld [smem:[#allocation0]]
  $region34: #{tpu_custom_call.1} parent=0
    _
  %s5 = ssub.s32 1, %s3
  %s6 = scalar_select 0, %s5, %s3
  $region1: #{tpu_custom_call.1} parent=0
    #allocation3 [shape = 'u8[16384]{0}', space=vmem, size = 0x4000, scoped, tag = 'input window, operand 0, single buffered']
    #allocation4 [shape = 's32[1]{0}', space=sflag, size = 0x4, scoped, tag = 'scoped memory for tpu_custom_call.1']
    #allocation5 [shape = 's32[1]{0}', space=sflag, size = 0x4, scoped, tag = 'scoped memory for tpu_custom_call.1']
    #allocation6 [shape = 'u8[16384]{0}', space=vmem, size = 0x4000, scoped, tag = 'input window, operand 1, single buffered']
    #allocation7 [shape = 's32[1]{0}', space=sflag, size = 0x4, scoped, tag = 'scoped memory for tpu_custom_call.1']
    #allocation8 [shape = 'u8[4096]{0}', space=vmem, size = 0x1000, scoped, tag = 'output window, operand 0, single buffered']
    %7 = vsyncpa [#allocation4], 0
    %8 = vsyncpa [#allocation7], 0
    %9 = vsyncpa [#allocation5], 0
    // Predicated region
    $region2: #{tpu_custom_call.1} parent=1 // pred_check
      _
    $region3: #{tpu_custom_call.1} parent=1 // pred_check_branch
      %11 = sbr.rel (0) target = $region5
    $region4: #{tpu_custom_call.1} parent=1 // pred_region
      %s12 = sadd.s32 0, 0
      %s14 = ssub.s32 512, 512
      %15 = vsyncadd [#allocation4], %s14
      %s16 = smul.addr %s12, 4
      %s17 = smul.addr %s16, 128
      %s18 = scalar_lea.hbm %s0, %s17
      %s20 = sshll.u32 [#allocation3], 4
      %s21 = int_to_ptr.vmem [resolvable:$true] %s20
      %23 = dma.hbm_to_vmem [thread:$0]  %s18, 512, %s21, [#allocation4]
    $region5: #{tpu_custom_call.1} parent=1 // pred_fallthru
      _
    // Predicated region
    $region6: #{tpu_custom_call.1} parent=1 // pred_check
      _
    $region7: #{tpu_custom_call.1} parent=1 // pred_check_branch
      %25 = sbr.rel (0) target = $region9
    $region8: #{tpu_custom_call.1} parent=1 // pred_region
      %s26 = sadd.s32 0, 0
      %s28 = ssub.s32 512, 512
      %29 = vsyncadd [#allocation7], %s28
      %s30 = smul.addr %s26, 4
      %s31 = smul.addr %s30, 128
      %s32 = scalar_lea.hbm %s1, %s31
      %s34 = sshll.u32 [#allocation6], 4
      %s35 = int_to_ptr.vmem [resolvable:$true] %s34
      %37 = dma.hbm_to_vmem [thread:$0]  %s32, 512, %s35, [#allocation7]
    $region9: #{tpu_custom_call.1} parent=1 // pred_fallthru
      _
    // Predicated region
    $region10: #{tpu_custom_call.1} parent=1 // pred_check
      _
    $region11: #{tpu_custom_call.1} parent=1 // pred_check_branch
      %39 = sbr.rel (0) target = $region13
    $region12: #{tpu_custom_call.1} parent=1 // pred_region
      %40 = dma.done [#allocation4], 512
    $region13: #{tpu_custom_call.1} parent=1 // pred_fallthru
      _
    // Predicated region
    $region14: #{tpu_custom_call.1} parent=1 // pred_check
      _
    $region15: #{tpu_custom_call.1} parent=1 // pred_check_branch
      %42 = sbr.rel (0) target = $region17
    $region16: #{tpu_custom_call.1} parent=1 // pred_region
      %43 = dma.done [#allocation7], 512
    $region17: #{tpu_custom_call.1} parent=1 // pred_fallthru
      _
    %s44 = sadd.s32 0, 0
    %s45 = sadd.s32 0, 0
    %p46 = scmp.eq.s32.totalorder 0, 0
    // Predicated region
    $region18: #{tpu_custom_call.1} parent=1 // pred_check
      %p47 = pneg %p46
    $region19: #{tpu_custom_call.1} parent=1 // pred_check_branch
      %49 = sbr.rel (%p47) target = $region21
    $region20: #{tpu_custom_call.1} parent=1 // pred_region
      %50 = vst [vmem:[#allocation2] sm:$0xff] 0.0
    $region21: #{tpu_custom_call.1} parent=1 // pred_fallthru
      _
    %v51 = vld [vmem:[#allocation3] sm:$0xff]
    %v52 = vld [vmem:[#allocation3 + $0x8] sm:$0xff]
    %v53 = vld [vmem:[#allocation3 + $0x10] sm:$0xff]
    %v54 = vld [vmem:[#allocation3 + $0x18] sm:$0xff]
    %v55 = vld [vmem:[#allocation6] sm:$0xff]
    %v56 = vld [vmem:[#allocation6 + $0x8] sm:$0xff]
    %v57 = vld [vmem:[#allocation6 + $0x10] sm:$0xff]
    %v58 = vld [vmem:[#allocation6 + $0x18] sm:$0xff]
    %v59 = vsub.f32 %v51, %v55
    %v60 = vsub.f32 %v52, %v56
    %v61 = vsub.f32 %v53, %v57
    %v62 = vsub.f32 %v54, %v58
    %v63 = vand.u32 2147483647, %v59
    %v64 = vand.u32 2147483647, %v60
    %v65 = vand.u32 2147483647, %v61
    %v66 = vand.u32 2147483647, %v62
    %v67 = vadd.f32 %v63, %v64
    %v68 = vadd.f32 %v67, %v65
    %v69 = vadd.f32 %v68, %v66
    %70 = vadd.xlane.f32.xlu0 %v69
    %v71 = vpop.xlane.xlu0 %70
    %v72 = vld [vmem:[#allocation2] sm:$0xff]
    %vm73 = vcmask 7168
    %v74 = vsel %vm73, %v71, 0.0
    %75 = vadd.xlane.f32.xlu0 %v74
    %v76 = vpop.xlane.xlu0 %75
    %v77 = vrot.slane %v76, 4
    %v78 = vadd.f32 %v76, %v77
    %v79 = vrot.slane %v78, 2
    %v80 = vadd.f32 %v78, %v79
    %v81 = vrot.slane %v80, 1
    %v82 = vadd.f32 %v80, %v81
    %s83 = vtos %v82
    %v84 = vstv %s83
    %v85 = vadd.f32 %v72, %v84
    %86 = vst [vmem:[#allocation2] sm:$0xff] %v85
    // Predicated region
    $region22: #{tpu_custom_call.1} parent=1 // pred_check
      %p87 = pneg %p46
    $region23: #{tpu_custom_call.1} parent=1 // pred_check_branch
      %89 = sbr.rel (%p87) target = $region25
    $region24: #{tpu_custom_call.1} parent=1 // pred_region
      %v90 = vld [vmem:[#allocation2] sm:$0xff]
      %91 = vst [vmem:[#allocation8] sm:$0xff] %v90
    $region25: #{tpu_custom_call.1} parent=1 // pred_fallthru
      _
    // Predicated region
    $region26: #{tpu_custom_call.1} parent=1 // pred_check
      _
    $region27: #{tpu_custom_call.1} parent=1 // pred_check_branch
      %93 = sbr.rel (0) target = $region29
    $region28: #{tpu_custom_call.1} parent=1 // pred_region
      %s95 = ssub.s32 128, 128
      %96 = vsyncadd [#allocation5], %s95
      %s98 = sshll.u32 [#allocation8], 4
      %s99 = int_to_ptr.vmem [resolvable:$true] %s98
      %101 = dma.vmem_to_hbm [thread:$0]  %s99, 128, %s2, [#allocation5]
    $region29: #{tpu_custom_call.1} parent=1 // pred_fallthru
      _
    // Predicated region
    $region30: #{tpu_custom_call.1} parent=1 // pred_check
      _
    $region31: #{tpu_custom_call.1} parent=1 // pred_check_branch
      %103 = sbr.rel (0) target = $region33
    $region32: #{tpu_custom_call.1} parent=1 // pred_region
      %104 = dma.done [#allocation5], 128
    $region33: #{tpu_custom_call.1} parent=1 // pred_fallthru
      _
    %105 = vsyncpa [#allocation4], 1
    %106 = vsyncpa [#allocation7], 1
    %107 = vsyncpa [#allocation5], 1

</llo_original>
